<compile_context>
chip_gen: v5e
topology: v5e:2x2
jax: 0.10.0
libtpu: 0.0.40
codegen_flags: <defaults>
</compile_context>

<pallas_src>
import functools

import jax
import jax.numpy as jnp
from jax.experimental import pallas as pl
from jax.experimental.pallas import tpu as pltpu


def energy_head_kernel(xf_ref, e_ref, wt_ref, beff_ref, out_ref, *, inv_n):
    # xf_ref  : (B, N*D)  activations, flattened lane-dense (N*D is a multiple of 128)
    # e_ref   : (B, N)    base energies
    # wt_ref  : (1, N*D)  folded weight row (W1 @ W2) tiled N times along the flat axis
    # beff_ref: (1,)      folded bias b1 @ W2 + b2, SMEM scalar
    # out_ref : (B, 1)    per-batch mean energy
    xf = xf_ref[...].astype(jnp.float32)                           # no-op for f32 inputs
    e = e_ref[...].astype(jnp.float32)
    # One lane-dense VPU multiply + ONE XLU lane reduce per batch row (down from B*N
    # reduces).  Exact: the folded head is affine, so the mean over nodes commutes.
    pred_sum = jnp.sum(xf * wt_ref[...], axis=1, keepdims=True)    # (B, 1)
    e_sum = jnp.sum(e, axis=1, keepdims=True)                      # (B, 1)
    out_ref[...] = (pred_sum + e_sum) * inv_n + beff_ref[0]        # SMEM scalar broadcast


def disc_head_forward(tup, params):
    """tup = (pos_0, pos_1, E, x_a, x_v, x_d, box, metadata); returns (batch,)."""
    _, _, E, x_a, _, _, _, _ = tup
    w1, b1, w2, b2 = params
    B, N, D = x_a.shape
    assert E.shape == (B, N)

    # One-time algebraic fold (no nonlinearity between lin1 and lin2):
    #   lin2(lin1(x)) = x @ (W1 @ W2) + (b1 @ W2 + b2)        (kept in f32)
    w1f = w1.astype(jnp.float32)
    w2f = w2.astype(jnp.float32)
    w_eff = (w1f @ w2f).reshape(D)                                        # (D,)
    b_eff = (b1.astype(jnp.float32) @ w2f + b2.astype(jnp.float32)).reshape(1)  # (1,)

    # Lane-dense presentation: flatten nodes x features into one trailing axis and tile
    # the folded weight row across N so the whole head is a single multiply-reduce per
    # batch row.  x stays in its native dtype (bytes, not f32, on the HBM side).
    x_flat = x_a.reshape(B, N * D)
    w_tiled = jnp.tile(w_eff, N).reshape(1, N * D)

    out = pl.pallas_call(
        functools.partial(energy_head_kernel, inv_n=1.0 / N),
        out_shape=jax.ShapeDtypeStruct((B, 1), jnp.float32),
        grid_spec=pltpu.PrefetchScalarGridSpec(
            num_scalar_prefetch=0,
            grid=(1,),                                          # whole problem is a few KB
            in_specs=[
                pl.BlockSpec((B, N * D), lambda i: (0, 0)),     # x_a, flattened lane-dense
                pl.BlockSpec((B, N), lambda i: (0, 0)),         # E
                pl.BlockSpec((1, N * D), lambda i: (0, 0)),     # tiled folded weight row
                pl.BlockSpec(memory_space=pltpu.MemorySpace.SMEM),  # folded bias (scalar path)
            ],
            out_specs=pl.BlockSpec((B, 1), lambda i: (0, 0)),
        ),
        compiler_params=pltpu.CompilerParams(
            dimension_semantics=("arbitrary",)),                # tiny: keep on one TensorCore
    )(x_flat, E, w_tiled, b_eff)

    return out[:, 0]


def init_params(key, dim_a):
    k1, k2, k3, k4 = jax.random.split(key, 4)
    # TensLinear(0, dim_a, dim_a) and TensLinear(0, dim_a, 1): plain linears on the last dim.
    w1 = jax.random.normal(k1, (dim_a, dim_a), jnp.float32) * 0.1
    b1 = jax.random.normal(k2, (dim_a,), jnp.float32) * 0.1
    w2 = jax.random.normal(k3, (dim_a, 1), jnp.float32) * 0.1
    b2 = jax.random.normal(k4, (1,), jnp.float32) * 0.1
    return w1, b1, w2, b2


def reference_forward(tup, params):
    _, _, E, x_a, _, _, _, _ = tup
    w1, b1, w2, b2 = params
    h = jnp.einsum('bnd,de->bne', x_a, w1) + b1
    e_pred = (jnp.einsum('bne,eo->bno', h, w2) + b2)[..., 0]
    return (E + e_pred).mean(-1)


if __name__ == "__main__":
    key = jax.random.PRNGKey(0)
    batch, nodes, dim_a, dim_v, dim_d = 2, 16, 32, 8, 4

    kp, kx, ke, kv, kd, kpos = jax.random.split(key, 6)
    params = init_params(kp, dim_a)

    x_a = jax.random.normal(kx, (batch, nodes, dim_a), jnp.float32)
    E = jax.random.normal(ke, (batch, nodes), jnp.float32)
    x_v = jax.random.normal(kv, (batch, nodes, 3, dim_v), jnp.float32)   # unused by forward
    x_d = jax.random.normal(kd, (batch, nodes, dim_d), jnp.float32)      # unused by forward
    pos_0 = jax.random.normal(kpos, (batch, nodes, 3), jnp.float32)      # unused by forward
    pos_1 = pos_0                                                        # unused by forward
    box = jnp.eye(3, dtype=jnp.float32)                                  # unused by forward
    metadata = None                                                      # unused by forward

    tup = (pos_0, pos_1, E, x_a, x_v, x_d, box, metadata)

    out = disc_head_forward(tup, params)
    jax.block_until_ready(out)

    ref = reference_forward(tup, params)
    assert out.shape == (batch,)
    assert jnp.allclose(out, ref, atol=1e-4, rtol=1e-4), (out, ref)

    print("KERNEL_OK")
</pallas_src>

<mosaic_0001>
module attributes {stable_mosaic.version = 11 : i64} {
  func.func @energy_head_kernel(%arg0: i32, %arg1: memref<2x512xf32, #tpu.memory_space<vmem>>, %arg2: memref<2x16xf32, #tpu.memory_space<vmem>>, %arg3: memref<1x512xf32, #tpu.memory_space<vmem>>, %arg4: memref<1xf32, #tpu.memory_space<smem>>, %arg5: memref<2x1xf32, #tpu.memory_space<vmem>>) attributes {dimension_semantics = [#tpu.dimension_semantics<arbitrary>], iteration_bounds = array<i64: 1>, scalar_prefetch = 0 : i64, scratch_operands = 0 : i64, tpu.core_type = #tpu.core_type<tc>, window_params = [{pipeline_mode = #tpu.pipeline_mode<synchronous>, transform_indices = @transform_0, window_bounds = array<i64: 2, 512>}, {pipeline_mode = #tpu.pipeline_mode<synchronous>, transform_indices = @transform_1, window_bounds = array<i64: 2, 16>}, {pipeline_mode = #tpu.pipeline_mode<synchronous>, transform_indices = @transform_2, window_bounds = array<i64: 1, 512>}, {transform_indices = @transform_3, window_bounds = array<i64: 1>}, {pipeline_mode = #tpu.pipeline_mode<synchronous>, transform_indices = @transform_4, window_bounds = array<i64: 2, 1>}]} {
    %c0 = arith.constant 0 : index
    %c0_0 = arith.constant 0 : index
    %0 = vector.load %arg1[%c0, %c0_0] : memref<2x512xf32, #tpu.memory_space<vmem>>, vector<2x512xf32>
    %c0_1 = arith.constant 0 : index
    %c0_2 = arith.constant 0 : index
    %1 = vector.load %arg2[%c0_1, %c0_2] : memref<2x16xf32, #tpu.memory_space<vmem>>, vector<2x16xf32>
    %c0_3 = arith.constant 0 : index
    %c0_4 = arith.constant 0 : index
    %2 = vector.load %arg3[%c0_3, %c0_4] : memref<1x512xf32, #tpu.memory_space<vmem>>, vector<1x512xf32>
    %3 = vector.broadcast %2 : vector<1x512xf32> to vector<2x512xf32>
    %4 = arith.mulf %0, %3 : vector<2x512xf32>
    %cst = arith.constant dense<0.000000e+00> : vector<2xf32>
    %5 = vector.multi_reduction <add>, %4, %cst [1] : vector<2x512xf32> to vector<2xf32>
    %6 = vector.shape_cast %5 : vector<2xf32> to vector<2x1xf32>
    %cst_5 = arith.constant dense<0.000000e+00> : vector<2xf32>
    %7 = vector.multi_reduction <add>, %1, %cst_5 [1] : vector<2x16xf32> to vector<2xf32>
    %8 = vector.shape_cast %7 : vector<2xf32> to vector<2x1xf32>
    %9 = arith.addf %6, %8 : vector<2x1xf32>
    %cst_6 = arith.constant 6.250000e-02 : f32
    %10 = vector.broadcast %cst_6 : f32 to vector<2x1xf32>
    %11 = arith.mulf %9, %10 : vector<2x1xf32>
    %c0_7 = arith.constant 0 : index
    %12 = memref.load %arg4[%c0_7] : memref<1xf32, #tpu.memory_space<smem>>
    %13 = vector.broadcast %12 : f32 to vector<2x1xf32>
    %14 = arith.addf %11, %13 : vector<2x1xf32>
    %c0_8 = arith.constant 0 : index
    %c0_9 = arith.constant 0 : index
    %15 = vector.load %arg5[%c0_8, %c0_9] : memref<2x1xf32, #tpu.memory_space<vmem>>, vector<2x1xf32>
    tpu.vector_store %arg5[%c0_8, %c0_9], %14 {strides = array<i32>} : memref<2x1xf32, #tpu.memory_space<vmem>>, vector<2x1xf32>,
    return
  }
  func.func @transform_0(%arg0: i32) -> (i32, i32) {
    %c0_i32 = arith.constant 0 : i32
    %c0_i32_0 = arith.constant 0 : i32
    %c0_i32_1 = arith.constant 0 : i32
    return %c0_i32, %c0_i32_0 : i32, i32
  }
  func.func @transform_1(%arg0: i32) -> (i32, i32) {
    %c0_i32 = arith.constant 0 : i32
    %c0_i32_0 = arith.constant 0 : i32
    %c0_i32_1 = arith.constant 0 : i32
    return %c0_i32, %c0_i32_0 : i32, i32
  }
  func.func @transform_2(%arg0: i32) -> (i32, i32) {
    %c0_i32 = arith.constant 0 : i32
    %c0_i32_0 = arith.constant 0 : i32
    %c0_i32_1 = arith.constant 0 : i32
    return %c0_i32, %c0_i32_0 : i32, i32
  }
  func.func @transform_3(%arg0: i32) -> i32 {
    %c0_i32 = arith.constant 0 : i32
    %c0_i32_0 = arith.constant 0 : i32
    return %c0_i32 : i32
  }
  func.func @transform_4(%arg0: i32) -> (i32, i32) {
    %c0_i32 = arith.constant 0 : i32
    %c0_i32_0 = arith.constant 0 : i32
    %c0_i32_1 = arith.constant 0 : i32
    return %c0_i32, %c0_i32_0 : i32, i32
  }
}

</mosaic_0001>

<llo_original>
// kernel: tpu_custom_call.1
$region0: #{tpu_custom_call.1}
  #allocation0 [shape = 'u32[]', space=smem, size = 0x4, offset = 0x4, fixed_abs, tag = 'smem constant byte address 0x4 - core index']
  #allocation1 [shape = 'u32[72,128]{1,0:T(1,128)}', space=vmem, size = 0x9000, scoped, tag = 'internal scratch']
  #allocation2 [shape = 'f32[1]{0:T(128)S(6)}', space=smem, size = 0x200, scoped, tag = 'scoped memory for tpu_custom_call.1']
  %s0 = inlined_call_operand.hbm [shape: f32[2,512], index: 0, kind: input, shape index: {}]
  %s1 = inlined_call_operand.vmem [shape: f32[2,16], index: 1, kind: input, shape index: {}]
  %s2 = inlined_call_operand.hbm [shape: f32[1,512], index: 2, kind: input, shape index: {}]
  %s3 = inlined_call_operand.<no memory space> [shape: f32[1], index: 3, kind: input, shape index: {}]
  %s4 = inlined_call_operand.vmem [shape: f32[2,1], index: 4, kind: output, shape index: {}]
  %s5 = sld [smem:[#allocation0]]
  $region34: #{tpu_custom_call.1} parent=0
    _
  %s7 = ssub.s32 1, %s5
  %s8 = scalar_select 0, %s7, %s5
  %9 = sst [smem:[#allocation2]] %s3
  $region1: #{tpu_custom_call.1} parent=0
    #allocation3 [shape = 'u8[4096]{0}', space=vmem, size = 0x1000, scoped, tag = 'input window, operand 0, single buffered']
    #allocation4 [shape = 's32[1]{0}', space=sflag, size = 0x4, scoped, tag = 'scoped memory for tpu_custom_call.1']
    #allocation5 [shape = 'u8[2048]{0}', space=vmem, size = 0x800, scoped, tag = 'input window, operand 2, single buffered']
    #allocation6 [shape = 's32[1]{0}', space=sflag, size = 0x4, scoped, tag = 'scoped memory for tpu_custom_call.1']
    %10 = vsyncpa [#allocation4], 0
    %11 = vsyncpa [#allocation6], 0
    // Predicated region
    $region2: #{tpu_custom_call.1} parent=1 // pred_check
      _
    $region3: #{tpu_custom_call.1} parent=1 // pred_check_branch
      %13 = sbr.rel (0) target = $region5
    $region4: #{tpu_custom_call.1} parent=1 // pred_region
      %15 = vsyncadd [#allocation4], 0
      %s17 = sshll.u32 %s0, 4
      %s18 = int_to_ptr.hbm [resolvable:$true] %s17
      %s19 = sshll.u32 [#allocation3], 4
      %s20 = int_to_ptr.vmem [resolvable:$true] %s19
      %22 = dma.hbm_to_vmem [thread:$0]  %s18, 128, %s20, [#allocation4]
    $region5: #{tpu_custom_call.1} parent=1 // pred_fallthru
      _
    // Predicated region
    $region6: #{tpu_custom_call.1} parent=1 // pred_check
      _
    $region7: #{tpu_custom_call.1} parent=1 // pred_check_branch
      %24 = sbr.rel (0) target = $region9
    $region8: #{tpu_custom_call.1} parent=1 // pred_region
      _
    $region9: #{tpu_custom_call.1} parent=1 // pred_fallthru
      _
    // Predicated region
    $region10: #{tpu_custom_call.1} parent=1 // pred_check
      _
    $region11: #{tpu_custom_call.1} parent=1 // pred_check_branch
      %26 = sbr.rel (0) target = $region13
    $region12: #{tpu_custom_call.1} parent=1 // pred_region
      %28 = vsyncadd [#allocation6], 0
      %s30 = sshll.u32 %s2, 4
      %s31 = int_to_ptr.hbm [resolvable:$true] %s30
      %s32 = sshll.u32 [#allocation5], 4
      %s33 = int_to_ptr.vmem [resolvable:$true] %s32
      %35 = dma.hbm_to_vmem [thread:$0]  %s31, 64, %s33, [#allocation6]
    $region13: #{tpu_custom_call.1} parent=1 // pred_fallthru
      _
    // Predicated region
    $region14: #{tpu_custom_call.1} parent=1 // pred_check
      _
    $region15: #{tpu_custom_call.1} parent=1 // pred_check_branch
      %37 = sbr.rel (0) target = $region17
    $region16: #{tpu_custom_call.1} parent=1 // pred_region
      _
    $region17: #{tpu_custom_call.1} parent=1 // pred_fallthru
      _
    // Predicated region
    $region18: #{tpu_custom_call.1} parent=1 // pred_check
      _
    $region19: #{tpu_custom_call.1} parent=1 // pred_check_branch
      %39 = sbr.rel (0) target = $region21
    $region20: #{tpu_custom_call.1} parent=1 // pred_region
      %41 = dma.done [#allocation4], 128
    $region21: #{tpu_custom_call.1} parent=1 // pred_fallthru
      _
    // Predicated region
    $region22: #{tpu_custom_call.1} parent=1 // pred_check
      _
    $region23: #{tpu_custom_call.1} parent=1 // pred_check_branch
      %43 = sbr.rel (0) target = $region25
    $region24: #{tpu_custom_call.1} parent=1 // pred_region
      %45 = dma.done [#allocation6], 64
    $region25: #{tpu_custom_call.1} parent=1 // pred_fallthru
      _
    %v46 = vld [vmem:[#allocation3] sm:$0xff]
    %v47 = vld [vmem:[%s1] sm:$0x3]
    %v48 = vld [vmem:[#allocation5] sm:$0xf]
    %v50 = vperm.slane %v48, 0
    %v51 = vperm.slane %v48, 1
    %v52 = vperm.slane %v48, 2
    %v53 = vperm.slane %v48, 3
    %v54 = vrot.slane %v51, 6
    %v55 = vrot.slane %v52, 4
    %v56 = vrot.slane %v53, 2
    %vm57 = vcmask 1041408
    %v58 = vsel %vm57, %v50, %v54
    %vm59 = vcmask 1045508
    %v60 = vsel %vm59, %v55, %v56
    %vm61 = vcmask 1043456
    %v62 = vsel %vm61, %v58, %v60
    %v64 = vmul.f32 %v46, %v62
    %66 = vst [vmem:[#allocation1] ss:$4 sm:$0xff] %v64
    %v67 = vld.sshfl [vmem:[#allocation1] sm:$0xff pattern:$0x73625140]
    %v68 = vld.sshfl [vmem:[#allocation1 + $0x8] sm:$0xff pattern:$0x73625140]
    %v69 = vld.sshfl [vmem:[#allocation1 + $0x10] sm:$0xff pattern:$0x73625140]
    %v70 = vld.sshfl [vmem:[#allocation1 + $0x18] sm:$0xff pattern:$0x73625140]
    %v75 = vsel %vm57, %v67, 0.0
    %v76 = vsel %vm57, %v68, 0.0
    %v77 = vadd.f32 %v75, %v76
    %v78 = vsel %vm57, %v69, 0.0
    %v79 = vadd.f32 %v77, %v78
    %v80 = vsel %vm57, %v70, 0.0
    %v81 = vadd.f32 %v79, %v80
    %82 = vadd.xlane.f32.xlu0 %v81
    %v83 = vpop.xlane.xlu0 %82
    %vm84 = vcmask 123904
    %v85 = vsel %vm84, %v47, 0.0
    %86 = vadd.xlane.f32.xlu0 %v85
    %v87 = vpop.xlane.xlu0 %86
    %v88 = vadd.f32 %v83, %v87
    %v89 = vmul.f32 %v88, 0.0625
    %s90 = sld [smem:[#allocation2]]
    %v91 = vstv %s90
    %v92 = vadd.f32 %v89, %v91
    %vm93 = vcmask 1024
    %94 = vst.msk [vmem:[%s4] sm:$0x3] %vm93, %v92
    // Predicated region
    $region26: #{tpu_custom_call.1} parent=1 // pred_check
      _
    $region27: #{tpu_custom_call.1} parent=1 // pred_check_branch
      %96 = sbr.rel (0) target = $region29
    $region28: #{tpu_custom_call.1} parent=1 // pred_region
      _
    $region29: #{tpu_custom_call.1} parent=1 // pred_fallthru
      _
    // Predicated region
    $region30: #{tpu_custom_call.1} parent=1 // pred_check
      _
    $region31: #{tpu_custom_call.1} parent=1 // pred_check_branch
      %98 = sbr.rel (0) target = $region33
    $region32: #{tpu_custom_call.1} parent=1 // pred_region
      _
    $region33: #{tpu_custom_call.1} parent=1 // pred_fallthru
      _
    %99 = vsyncpa [#allocation4], 1
    %100 = vsyncpa [#allocation6], 1

</llo_original>
